<compile_context>
chip_gen: v5e
topology: v5e:2x2
jax: 0.10.0
libtpu: 0.0.40
codegen_flags: <defaults>
</compile_context>

<pallas_src>
import jax
import jax.numpy as jnp
from jax.experimental import pallas as pl
from jax.experimental.pallas import tpu as pltpu

INPUT_SIZE = 11
HIDDEN_SIZE = 64
FC1_SIZE = 128
OUTPUT_SIZE = 1


def _rnn_kernel(x_ref, wih_ref, whh_ref, b_ref, w1_ref, b1_ref, w2row_ref,
                b2_ref, out_ref, h_scratch):
    """One time-tile of the recurrence; head + output store on last grid step.

    x_ref:     (T_TILE*B, I)  time-major rows, grouped [t0 rows, t1 rows, ...]
    h_scratch: (B, H)         hidden state carried across grid steps
    out_ref:   (B, 1)
    """
    ti = pl.program_id(0)

    @pl.when(ti == 0)
    def _():
        # PyTorch default initial hidden state h_0 = 0.
        h_scratch[...] = jnp.zeros_like(h_scratch)

    bsz = h_scratch.shape[0]
    t_steps = x_ref.shape[0] // bsz

    # Hoisted input projection for the whole tile: ONE MXU matmul plus one
    # fused bias add (b = b_ih + b_hh, precomputed once in the wrapper).
    pre_x = (jnp.dot(x_ref[...], wih_ref[...],
                     preferred_element_type=jnp.float32)
             + b_ref[...])                                    # (T_TILE*B, H)

    whh = whh_ref[...]
    h = h_scratch[...]
    # Fully unrolled serial recurrence: only tanh(pre + h @ W_hh) per step.
    for t in range(t_steps):
        pre = pre_x[t * bsz:(t + 1) * bsz, :]                 # (B, H) static slice
        h = jnp.tanh(pre + jnp.dot(h, whh,
                                   preferred_element_type=jnp.float32))
    h_scratch[...] = h

    @pl.when(ti == pl.num_programs(0) - 1)
    def _():
        # fc1 + ReLU
        z1 = (jnp.dot(h, w1_ref[...], preferred_element_type=jnp.float32)
              + b1_ref[...])
        z1 = jnp.maximum(z1, 0.0)
        # TODO(synk): F.dropout defaults to training=True (p=0.5, stochastic);
        # implemented as identity (inference semantics) to stay deterministic.
        # fc2 has N=1 -> VPU lane reduction instead of an N=1 MXU pass.
        out = jnp.sum(z1 * w2row_ref[...], axis=-1, keepdims=True) + b2_ref[...]
        out_ref[...] = out                                    # (B, 1)


def _pick_t_tile(T, B, target_rows=128):
    """Largest divisor of T whose (T_TILE*B, I) block is legal (rows % 8 == 0
    or covers the full array) and stays around `target_rows` rows."""
    best = T  # full array is always a legal block
    for cand in range(1, T + 1):
        if T % cand:
            continue
        rows = cand * B
        if (rows % 8 == 0 or cand == T) and rows <= max(target_rows, B):
            best = cand
    return best


def rnn_forward(x_btI, params, *, t_tile=None):
    """x_btI: (B, T, I) float32 (PyTorch batch-first). Returns shape (B,)."""
    B, T, I = x_btI.shape
    assert I == INPUT_SIZE

    if t_tile is None:
        t_tile = _pick_t_tile(T, B)
    rows = t_tile * B
    assert T % t_tile == 0, "t_tile must divide T"
    assert rows % 8 == 0 or t_tile == T, "(t_tile * B) must be a multiple of 8"
    num_tiles = T // t_tile

    # Time-major, then flatten (T, B) -> rows so each grid step streams a
    # 2-D (t_tile*B, I) slab (avoids any in-kernel reshape).
    x_rows = jnp.transpose(x_btI.astype(jnp.float32), (1, 0, 2)).reshape(T * B, I)

    # Fuse the two RNN biases once (numerically identical to adding per step).
    b_rnn = params["b_ih"] + params["b_hh"]              # (1, H)
    w2_row = params["w_fc2"].T                           # (1, FC1); OUTPUT_SIZE == 1

    cost = pl.CostEstimate(
        flops=(2 * T * B * (INPUT_SIZE * HIDDEN_SIZE + HIDDEN_SIZE * HIDDEN_SIZE)
               + 2 * B * (HIDDEN_SIZE * FC1_SIZE + FC1_SIZE * OUTPUT_SIZE)),
        transcendentals=T * B * HIDDEN_SIZE,
        bytes_accessed=4 * (T * B * INPUT_SIZE
                            + INPUT_SIZE * HIDDEN_SIZE + HIDDEN_SIZE * HIDDEN_SIZE
                            + HIDDEN_SIZE + HIDDEN_SIZE * FC1_SIZE + FC1_SIZE
                            + FC1_SIZE + OUTPUT_SIZE + B * OUTPUT_SIZE),
    )

    grid_spec = pltpu.PrefetchScalarGridSpec(
        num_scalar_prefetch=0,
        grid=(num_tiles,),
        in_specs=[
            pl.BlockSpec((rows, INPUT_SIZE), lambda t: (t, 0)),         # streamed x
            pl.BlockSpec((INPUT_SIZE, HIDDEN_SIZE), lambda t: (0, 0)),  # W_ih
            pl.BlockSpec((HIDDEN_SIZE, HIDDEN_SIZE), lambda t: (0, 0)), # W_hh
            pl.BlockSpec((1, HIDDEN_SIZE), lambda t: (0, 0)),           # b_ih + b_hh
            pl.BlockSpec((HIDDEN_SIZE, FC1_SIZE), lambda t: (0, 0)),    # W_fc1
            pl.BlockSpec((1, FC1_SIZE), lambda t: (0, 0)),              # b_fc1
            pl.BlockSpec((1, FC1_SIZE), lambda t: (0, 0)),              # W_fc2 (row)
            pl.BlockSpec((1, OUTPUT_SIZE), lambda t: (0, 0)),           # b_fc2
        ],
        out_specs=pl.BlockSpec((B, OUTPUT_SIZE), lambda t: (0, 0)),
        scratch_shapes=[pltpu.VMEM((B, HIDDEN_SIZE), jnp.float32)],
    )

    out = pl.pallas_call(
        _rnn_kernel,
        out_shape=jax.ShapeDtypeStruct((B, OUTPUT_SIZE), jnp.float32),
        grid_spec=grid_spec,
        compiler_params=pltpu.CompilerParams(
            dimension_semantics=("arbitrary",),    # time axis is serial
            vmem_limit_bytes=32 * 1024 * 1024,     # well under v7x's 64 MiB
        ),
        cost_estimate=cost,
    )(x_rows, params["w_ih"], params["w_hh"], b_rnn,
      params["w_fc1"], params["b_fc1"], w2_row, params["b_fc2"])

    # (B, 1) -> (B,). NOTE: torch.squeeze would also drop the batch dim when
    # B == 1; we keep the batch axis (shape-stable), per review.
    return jnp.squeeze(out, axis=-1)


def init_params(key):
    """Deterministic parameter init mirroring the PyTorch module's shapes.
    Weights stored transposed: (in_features, out_features)."""
    ks = jax.random.split(key, 8)
    bound_rnn = 1.0 / jnp.sqrt(HIDDEN_SIZE)
    bound_fc1 = 1.0 / jnp.sqrt(HIDDEN_SIZE)
    bound_fc2 = 1.0 / jnp.sqrt(FC1_SIZE)

    def u(k, shape, bound):
        return jax.random.uniform(k, shape, jnp.float32, -bound, bound)

    return {
        "w_ih":  u(ks[0], (INPUT_SIZE, HIDDEN_SIZE), bound_rnn),
        "w_hh":  u(ks[1], (HIDDEN_SIZE, HIDDEN_SIZE), bound_rnn),
        "b_ih":  u(ks[2], (1, HIDDEN_SIZE), bound_rnn),
        "b_hh":  u(ks[3], (1, HIDDEN_SIZE), bound_rnn),
        "w_fc1": u(ks[4], (HIDDEN_SIZE, FC1_SIZE), bound_fc1),
        "b_fc1": u(ks[5], (1, FC1_SIZE), bound_fc1),
        "w_fc2": u(ks[6], (FC1_SIZE, OUTPUT_SIZE), bound_fc2),
        "b_fc2": u(ks[7], (1, OUTPUT_SIZE), bound_fc2),
    }


def _reference(x_btI, p):
    """Pure-JAX reference of the same forward (dropout = identity)."""
    x = jnp.transpose(x_btI.astype(jnp.float32), (1, 0, 2))  # (T, B, I)
    h = jnp.zeros((x.shape[1], HIDDEN_SIZE), jnp.float32)
    for t in range(x.shape[0]):
        h = jnp.tanh(x[t] @ p["w_ih"] + h @ p["w_hh"] + p["b_ih"] + p["b_hh"])
    z = jnp.maximum(h @ p["w_fc1"] + p["b_fc1"], 0.0)
    return jnp.squeeze(z @ p["w_fc2"] + p["b_fc2"], axis=-1)


if __name__ == "__main__":
    key = jax.random.PRNGKey(0)
    k_x, k_p = jax.random.split(key)

    B, T = 2, 8
    x = jax.random.normal(k_x, (B, T, INPUT_SIZE), jnp.float32)
    params = init_params(k_p)
    y_ref = _reference(x, params)

    # Default (auto) tiling: whole sequence in one grid step.
    y_full = jax.block_until_ready(rnn_forward(x, params))
    assert y_full.shape == (B,), y_full.shape
    assert jnp.allclose(y_full, y_ref, atol=1e-5, rtol=1e-5), (y_full, y_ref)

    # Explicit small time tile: exercises the multi-step streaming grid with
    # the hidden state carried in VMEM scratch across grid iterations.
    y_stream = jax.block_until_ready(rnn_forward(x, params, t_tile=4))
    assert y_stream.shape == (B,), y_stream.shape
    assert jnp.allclose(y_stream, y_ref, atol=1e-5, rtol=1e-5), (y_stream, y_ref)

    print("KERNEL_OK")
</pallas_src>

<mosaic_0001>
module attributes {stable_mosaic.version = 11 : i64} {
  func.func @_rnn_kernel(%arg0: i32, %arg1: memref<16x11xf32, #tpu.memory_space<vmem>>, %arg2: memref<11x64xf32, #tpu.memory_space<vmem>>, %arg3: memref<64x64xf32, #tpu.memory_space<vmem>>, %arg4: memref<1x64xf32, #tpu.memory_space<vmem>>, %arg5: memref<64x128xf32, #tpu.memory_space<vmem>>, %arg6: memref<1x128xf32, #tpu.memory_space<vmem>>, %arg7: memref<1x128xf32, #tpu.memory_space<vmem>>, %arg8: memref<1x1xf32, #tpu.memory_space<vmem>>, %arg9: memref<2x1xf32, #tpu.memory_space<vmem>>, %arg10: memref<2x64xf32, #tpu.memory_space<vmem>>) attributes {dimension_semantics = [#tpu.dimension_semantics<arbitrary>], iteration_bounds = array<i64: 1>, scalar_prefetch = 0 : i64, scratch_operands = 1 : i64, tpu.core_type = #tpu.core_type<tc>, window_params = [{transform_indices = @transform_0, window_bounds = array<i64: 16, 11>}, {pipeline_mode = #tpu.pipeline_mode<synchronous>, transform_indices = @transform_1, window_bounds = array<i64: 11, 64>}, {pipeline_mode = #tpu.pipeline_mode<synchronous>, transform_indices = @transform_2, window_bounds = array<i64: 64, 64>}, {pipeline_mode = #tpu.pipeline_mode<synchronous>, transform_indices = @transform_3, window_bounds = array<i64: 1, 64>}, {pipeline_mode = #tpu.pipeline_mode<synchronous>, transform_indices = @transform_4, window_bounds = array<i64: 64, 128>}, {pipeline_mode = #tpu.pipeline_mode<synchronous>, transform_indices = @transform_5, window_bounds = array<i64: 1, 128>}, {pipeline_mode = #tpu.pipeline_mode<synchronous>, transform_indices = @transform_6, window_bounds = array<i64: 1, 128>}, {pipeline_mode = #tpu.pipeline_mode<synchronous>, transform_indices = @transform_7, window_bounds = array<i64: 1, 1>}, {pipeline_mode = #tpu.pipeline_mode<synchronous>, transform_indices = @transform_8, window_bounds = array<i64: 2, 1>}]} {
    %c0_i32 = arith.constant 0 : i32
    %0 = arith.cmpi eq, %arg0, %c0_i32 : i32
    %1 = arith.extui %0 : i1 to i32
    %c0_i32_0 = arith.constant 0 : i32
    %2 = arith.cmpi ne, %1, %c0_i32_0 : i32
    scf.if %2 {
      %cst_22 = arith.constant 0.000000e+00 : f32
      %47 = vector.broadcast %cst_22 : f32 to vector<2x64xf32>
      %c0_23 = arith.constant 0 : index
      %c0_24 = arith.constant 0 : index
      %48 = vector.load %arg10[%c0_23, %c0_24] : memref<2x64xf32, #tpu.memory_space<vmem>>, vector<2x64xf32>
      tpu.vector_store %arg10[%c0_23, %c0_24], %47 {strides = array<i32>} : memref<2x64xf32, #tpu.memory_space<vmem>>, vector<2x64xf32>,
    } else {
    }
    %c0 = arith.constant 0 : index
    %c0_1 = arith.constant 0 : index
    %3 = vector.load %arg1[%c0, %c0_1] : memref<16x11xf32, #tpu.memory_space<vmem>>, vector<16x11xf32>
    %c0_2 = arith.constant 0 : index
    %c0_3 = arith.constant 0 : index
    %4 = vector.load %arg2[%c0_2, %c0_3] : memref<11x64xf32, #tpu.memory_space<vmem>>, vector<11x64xf32>
    %cst = arith.constant dense<0.000000e+00> : vector<16x64xf32>
    %5 = tpu.matmul %3, %4, %cst {dimension_numbers = #tpu.dot_dimension_numbers<[1], [0], [0], [1], [0, 0, 1, 1], [], []>} : vector<16x11xf32>, vector<11x64xf32>, vector<16x64xf32> -> vector<16x64xf32>
    %c0_4 = arith.constant 0 : index
    %c0_5 = arith.constant 0 : index
    %6 = vector.load %arg4[%c0_4, %c0_5] : memref<1x64xf32, #tpu.memory_space<vmem>>, vector<1x64xf32>
    %7 = vector.broadcast %6 : vector<1x64xf32> to vector<16x64xf32>
    %8 = arith.addf %5, %7 : vector<16x64xf32>
    %c0_6 = arith.constant 0 : index
    %c0_7 = arith.constant 0 : index
    %9 = vector.load %arg3[%c0_6, %c0_7] : memref<64x64xf32, #tpu.memory_space<vmem>>, vector<64x64xf32>
    %c0_8 = arith.constant 0 : index
    %c0_9 = arith.constant 0 : index
    %10 = vector.load %arg10[%c0_8, %c0_9] : memref<2x64xf32, #tpu.memory_space<vmem>>, vector<2x64xf32>
    %11 = vector.extract_strided_slice %8 {offsets = [0, 0], sizes = [2, 64], strides = [1, 1]} : vector<16x64xf32> to vector<2x64xf32>
    %cst_10 = arith.constant dense<0.000000e+00> : vector<2x64xf32>
    %12 = tpu.matmul %10, %9, %cst_10 {dimension_numbers = #tpu.dot_dimension_numbers<[1], [0], [0], [1], [0, 0, 1, 1], [], []>} : vector<2x64xf32>, vector<64x64xf32>, vector<2x64xf32> -> vector<2x64xf32>
    %13 = arith.addf %11, %12 : vector<2x64xf32>
    %14 = math.tanh %13 : vector<2x64xf32>
    %15 = vector.extract_strided_slice %8 {offsets = [2, 0], sizes = [2, 64], strides = [1, 1]} : vector<16x64xf32> to vector<2x64xf32>
    %cst_11 = arith.constant dense<0.000000e+00> : vector<2x64xf32>
    %16 = tpu.matmul %14, %9, %cst_11 {dimension_numbers = #tpu.dot_dimension_numbers<[1], [0], [0], [1], [0, 0, 1, 1], [], []>} : vector<2x64xf32>, vector<64x64xf32>, vector<2x64xf32> -> vector<2x64xf32>
    %17 = arith.addf %15, %16 : vector<2x64xf32>
    %18 = math.tanh %17 : vector<2x64xf32>
    %19 = vector.extract_strided_slice %8 {offsets = [4, 0], sizes = [2, 64], strides = [1, 1]} : vector<16x64xf32> to vector<2x64xf32>
    %cst_12 = arith.constant dense<0.000000e+00> : vector<2x64xf32>
    %20 = tpu.matmul %18, %9, %cst_12 {dimension_numbers = #tpu.dot_dimension_numbers<[1], [0], [0], [1], [0, 0, 1, 1], [], []>} : vector<2x64xf32>, vector<64x64xf32>, vector<2x64xf32> -> vector<2x64xf32>
    %21 = arith.addf %19, %20 : vector<2x64xf32>
    %22 = math.tanh %21 : vector<2x64xf32>
    %23 = vector.extract_strided_slice %8 {offsets = [6, 0], sizes = [2, 64], strides = [1, 1]} : vector<16x64xf32> to vector<2x64xf32>
    %cst_13 = arith.constant dense<0.000000e+00> : vector<2x64xf32>
    %24 = tpu.matmul %22, %9, %cst_13 {dimension_numbers = #tpu.dot_dimension_numbers<[1], [0], [0], [1], [0, 0, 1, 1], [], []>} : vector<2x64xf32>, vector<64x64xf32>, vector<2x64xf32> -> vector<2x64xf32>
    %25 = arith.addf %23, %24 : vector<2x64xf32>
    %26 = math.tanh %25 : vector<2x64xf32>
    %27 = vector.extract_strided_slice %8 {offsets = [8, 0], sizes = [2, 64], strides = [1, 1]} : vector<16x64xf32> to vector<2x64xf32>
    %cst_14 = arith.constant dense<0.000000e+00> : vector<2x64xf32>
    %28 = tpu.matmul %26, %9, %cst_14 {dimension_numbers = #tpu.dot_dimension_numbers<[1], [0], [0], [1], [0, 0, 1, 1], [], []>} : vector<2x64xf32>, vector<64x64xf32>, vector<2x64xf32> -> vector<2x64xf32>
    %29 = arith.addf %27, %28 : vector<2x64xf32>
    %30 = math.tanh %29 : vector<2x64xf32>
    %31 = vector.extract_strided_slice %8 {offsets = [10, 0], sizes = [2, 64], strides = [1, 1]} : vector<16x64xf32> to vector<2x64xf32>
    %cst_15 = arith.constant dense<0.000000e+00> : vector<2x64xf32>
    %32 = tpu.matmul %30, %9, %cst_15 {dimension_numbers = #tpu.dot_dimension_numbers<[1], [0], [0], [1], [0, 0, 1, 1], [], []>} : vector<2x64xf32>, vector<64x64xf32>, vector<2x64xf32> -> vector<2x64xf32>
    %33 = arith.addf %31, %32 : vector<2x64xf32>
    %34 = math.tanh %33 : vector<2x64xf32>
    %35 = vector.extract_strided_slice %8 {offsets = [12, 0], sizes = [2, 64], strides = [1, 1]} : vector<16x64xf32> to vector<2x64xf32>
    %cst_16 = arith.constant dense<0.000000e+00> : vector<2x64xf32>
    %36 = tpu.matmul %34, %9, %cst_16 {dimension_numbers = #tpu.dot_dimension_numbers<[1], [0], [0], [1], [0, 0, 1, 1], [], []>} : vector<2x64xf32>, vector<64x64xf32>, vector<2x64xf32> -> vector<2x64xf32>
    %37 = arith.addf %35, %36 : vector<2x64xf32>
    %38 = math.tanh %37 : vector<2x64xf32>
    %39 = vector.extract_strided_slice %8 {offsets = [14, 0], sizes = [2, 64], strides = [1, 1]} : vector<16x64xf32> to vector<2x64xf32>
    %cst_17 = arith.constant dense<0.000000e+00> : vector<2x64xf32>
    %40 = tpu.matmul %38, %9, %cst_17 {dimension_numbers = #tpu.dot_dimension_numbers<[1], [0], [0], [1], [0, 0, 1, 1], [], []>} : vector<2x64xf32>, vector<64x64xf32>, vector<2x64xf32> -> vector<2x64xf32>
    %41 = arith.addf %39, %40 : vector<2x64xf32>
    %42 = math.tanh %41 : vector<2x64xf32>
    %c0_18 = arith.constant 0 : index
    %c0_19 = arith.constant 0 : index
    %43 = vector.load %arg10[%c0_18, %c0_19] : memref<2x64xf32, #tpu.memory_space<vmem>>, vector<2x64xf32>
    tpu.vector_store %arg10[%c0_18, %c0_19], %42 {strides = array<i32>} : memref<2x64xf32, #tpu.memory_space<vmem>>, vector<2x64xf32>,
    %c0_i32_20 = arith.constant 0 : i32
    %44 = arith.cmpi eq, %arg0, %c0_i32_20 : i32
    %45 = arith.extui %44 : i1 to i32
    %c0_i32_21 = arith.constant 0 : i32
    %46 = arith.cmpi ne, %45, %c0_i32_21 : i32
    scf.if %46 {
      %c0_22 = arith.constant 0 : index
      %c0_23 = arith.constant 0 : index
      %47 = vector.load %arg5[%c0_22, %c0_23] : memref<64x128xf32, #tpu.memory_space<vmem>>, vector<64x128xf32>
      %cst_24 = arith.constant dense<0.000000e+00> : vector<2x128xf32>
      %48 = tpu.matmul %42, %47, %cst_24 {dimension_numbers = #tpu.dot_dimension_numbers<[1], [0], [0], [1], [0, 0, 1, 1], [], []>} : vector<2x64xf32>, vector<64x128xf32>, vector<2x128xf32> -> vector<2x128xf32>
      %c0_25 = arith.constant 0 : index
      %c0_26 = arith.constant 0 : index
      %49 = vector.load %arg6[%c0_25, %c0_26] : memref<1x128xf32, #tpu.memory_space<vmem>>, vector<1x128xf32>
      %50 = vector.broadcast %49 : vector<1x128xf32> to vector<2x128xf32>
      %51 = arith.addf %48, %50 : vector<2x128xf32>
      %cst_27 = arith.constant 0.000000e+00 : f32
      %52 = vector.broadcast %cst_27 : f32 to vector<2x128xf32>
      %53 = arith.maximumf %51, %52 : vector<2x128xf32>
      %c0_28 = arith.constant 0 : index
      %c0_29 = arith.constant 0 : index
      %54 = vector.load %arg7[%c0_28, %c0_29] : memref<1x128xf32, #tpu.memory_space<vmem>>, vector<1x128xf32>
      %55 = vector.broadcast %54 : vector<1x128xf32> to vector<2x128xf32>
      %56 = arith.mulf %53, %55 : vector<2x128xf32>
      %cst_30 = arith.constant dense<0.000000e+00> : vector<2xf32>
      %57 = vector.multi_reduction <add>, %56, %cst_30 [1] : vector<2x128xf32> to vector<2xf32>
      %58 = vector.shape_cast %57 : vector<2xf32> to vector<2x1xf32>
      %c0_31 = arith.constant 0 : index
      %c0_32 = arith.constant 0 : index
      %59 = vector.load %arg8[%c0_31, %c0_32] : memref<1x1xf32, #tpu.memory_space<vmem>>, vector<1x1xf32>
      %60 = vector.broadcast %59 : vector<1x1xf32> to vector<2x1xf32>
      %61 = arith.addf %58, %60 : vector<2x1xf32>
      %c0_33 = arith.constant 0 : index
      %c0_34 = arith.constant 0 : index
      %62 = vector.load %arg9[%c0_33, %c0_34] : memref<2x1xf32, #tpu.memory_space<vmem>>, vector<2x1xf32>
      tpu.vector_store %arg9[%c0_33, %c0_34], %61 {strides = array<i32>} : memref<2x1xf32, #tpu.memory_space<vmem>>, vector<2x1xf32>,
    } else {
    }
    return
  }
  func.func @transform_0(%arg0: i32) -> (i32, i32) {
    %c0_i32 = arith.constant 0 : i32
    %c0_i32_0 = arith.constant 0 : i32
    return %arg0, %c0_i32 : i32, i32
  }
  func.func @transform_1(%arg0: i32) -> (i32, i32) {
    %c0_i32 = arith.constant 0 : i32
    %c0_i32_0 = arith.constant 0 : i32
    %c0_i32_1 = arith.constant 0 : i32
    return %c0_i32, %c0_i32_0 : i32, i32
  }
  func.func @transform_2(%arg0: i32) -> (i32, i32) {
    %c0_i32 = arith.constant 0 : i32
    %c0_i32_0 = arith.constant 0 : i32
    %c0_i32_1 = arith.constant 0 : i32
    return %c0_i32, %c0_i32_0 : i32, i32
  }
  func.func @transform_3(%arg0: i32) -> (i32, i32) {
    %c0_i32 = arith.constant 0 : i32
    %c0_i32_0 = arith.constant 0 : i32
    %c0_i32_1 = arith.constant 0 : i32
    return %c0_i32, %c0_i32_0 : i32, i32
  }
  func.func @transform_4(%arg0: i32) -> (i32, i32) {
    %c0_i32 = arith.constant 0 : i32
    %c0_i32_0 = arith.constant 0 : i32
    %c0_i32_1 = arith.constant 0 : i32
    return %c0_i32, %c0_i32_0 : i32, i32
  }
  func.func @transform_5(%arg0: i32) -> (i32, i32) {
    %c0_i32 = arith.constant 0 : i32
    %c0_i32_0 = arith.constant 0 : i32
    %c0_i32_1 = arith.constant 0 : i32
    return %c0_i32, %c0_i32_0 : i32, i32
  }
  func.func @transform_6(%arg0: i32) -> (i32, i32) {
    %c0_i32 = arith.constant 0 : i32
    %c0_i32_0 = arith.constant 0 : i32
    %c0_i32_1 = arith.constant 0 : i32
    return %c0_i32, %c0_i32_0 : i32, i32
  }
  func.func @transform_7(%arg0: i32) -> (i32, i32) {
    %c0_i32 = arith.constant 0 : i32
    %c0_i32_0 = arith.constant 0 : i32
    %c0_i32_1 = arith.constant 0 : i32
    return %c0_i32, %c0_i32_0 : i32, i32
  }
  func.func @transform_8(%arg0: i32) -> (i32, i32) {
    %c0_i32 = arith.constant 0 : i32
    %c0_i32_0 = arith.constant 0 : i32
    %c0_i32_1 = arith.constant 0 : i32
    return %c0_i32, %c0_i32_0 : i32, i32
  }
}

</mosaic_0001>

<llo_original>
// kernel: tpu_custom_call.1
$region0: #{tpu_custom_call.1}
  #allocation0 [shape = 'u32[]', space=smem, size = 0x4, offset = 0x4, fixed_abs, tag = 'smem constant byte address 0x4 - core index']
  #allocation1 [shape = 'u32[72,128]{1,0:T(1,128)}', space=vmem, size = 0x9000, scoped, tag = 'internal scratch']
  #allocation2 [shape = 'f32[2,64]{1,0:T(2,128)}', space=vmem, size = 0x400, scoped, tag = 'scratch operand']
  #allocation3 [shape = 'f32[1,1]{1,0:T(1,128)S(1)}', space=vmem, size = 0x200, scoped, tag = 'scoped memory for tpu_custom_call.1']
  %s0 = inlined_call_operand.hbm [shape: f32[16,11], index: 0, kind: input, shape index: {}]
  %s1 = inlined_call_operand.hbm [shape: f32[11,64], index: 1, kind: input, shape index: {}]
  %s2 = inlined_call_operand.hbm [shape: f32[64,64], index: 2, kind: input, shape index: {}]
  %s3 = inlined_call_operand.vmem [shape: f32[1,64], index: 3, kind: input, shape index: {}]
  %s4 = inlined_call_operand.hbm [shape: f32[64,128], index: 4, kind: input, shape index: {}]
  %s5 = inlined_call_operand.vmem [shape: f32[1,128], index: 5, kind: input, shape index: {}]
  %s6 = inlined_call_operand.vmem [shape: f32[1,128], index: 6, kind: input, shape index: {}]
  %s7 = inlined_call_operand.<no memory space> [shape: f32[1,1], index: 7, kind: input, shape index: {}]
  %s8 = inlined_call_operand.vmem [shape: f32[2,1], index: 8, kind: output, shape index: {}]
  %s9 = sld [smem:[#allocation0]]
  $region66: #{tpu_custom_call.1} parent=0
    _
  %s11 = ssub.s32 1, %s9
  %s12 = scalar_select 0, %s11, %s9
  %v13 = vstv %s7
  %14 = vst [vmem:[#allocation3] sm:$0x1] %v13
  $region1: #{tpu_custom_call.1} parent=0
    #allocation4 [shape = 'u8[8192]{0}', space=vmem, size = 0x2000, scoped, tag = 'input window, operand 0, single buffered']
    #allocation5 [shape = 's32[1]{0}', space=sflag, size = 0x4, scoped, tag = 'scoped memory for tpu_custom_call.1']
    #allocation6 [shape = 'u8[8192]{0}', space=vmem, size = 0x2000, scoped, tag = 'input window, operand 1, single buffered']
    #allocation7 [shape = 's32[1]{0}', space=sflag, size = 0x4, scoped, tag = 'scoped memory for tpu_custom_call.1']
    #allocation8 [shape = 'u8[32768]{0}', space=vmem, size = 0x8000, scoped, tag = 'input window, operand 2, single buffered']
    #allocation9 [shape = 'u8[32768]{0}', space=vmem, size = 0x8000, scoped, tag = 'input window, operand 4, single buffered']
    #allocation10 [shape = 's32[1]{0}', space=sflag, size = 0x4, scoped, tag = 'scoped memory for tpu_custom_call.1']
    %15 = vsyncpa [#allocation5], 0
    %16 = vsyncpa [#allocation7], 0
    %17 = vsyncpa [#allocation10], 0
    // Predicated region
    $region2: #{tpu_custom_call.1} parent=1 // pred_check
      _
    $region3: #{tpu_custom_call.1} parent=1 // pred_check_branch
      %19 = sbr.rel (0) target = $region5
    $region4: #{tpu_custom_call.1} parent=1 // pred_region
      %21 = vsyncadd [#allocation5], 0
      %s22 = sshll.u32 %s0, 4
      %s23 = int_to_ptr.hbm [resolvable:$true] %s22
      %s24 = sshll.u32 [#allocation4], 4
      %s25 = int_to_ptr.vmem [resolvable:$true] %s24
      %30 = dma.hbm_to_vmem [thread:$0]  %s23, 256, %s25, [#allocation5], 128, 128, 8
    $region5: #{tpu_custom_call.1} parent=1 // pred_fallthru
      _
    // Predicated region
    $region6: #{tpu_custom_call.1} parent=1 // pred_check
      _
    $region7: #{tpu_custom_call.1} parent=1 // pred_check_branch
      %32 = sbr.rel (0) target = $region9
    $region8: #{tpu_custom_call.1} parent=1 // pred_region
      %34 = vsyncadd [#allocation7], 0
      %s35 = sshll.u32 %s1, 4
      %s36 = int_to_ptr.hbm [resolvable:$true] %s35
      %s37 = sshll.u32 [#allocation6], 4
      %s38 = int_to_ptr.vmem [resolvable:$true] %s37
      %43 = dma.hbm_to_vmem [thread:$0]  %s36, 256, %s38, [#allocation7], 128, 128, 8
    $region9: #{tpu_custom_call.1} parent=1 // pred_fallthru
      _
    // Predicated region
    $region10: #{tpu_custom_call.1} parent=1 // pred_check
      _
    $region11: #{tpu_custom_call.1} parent=1 // pred_check_branch
      %45 = sbr.rel (0) target = $region13
    $region12: #{tpu_custom_call.1} parent=1 // pred_region
      %47 = vsyncadd [#allocation7], 0
      %s48 = sshll.u32 %s2, 4
      %s49 = int_to_ptr.hbm [resolvable:$true] %s48
      %s50 = sshll.u32 [#allocation8], 4
      %s51 = int_to_ptr.vmem [resolvable:$true] %s50
      %56 = dma.hbm_to_vmem [thread:$0]  %s49, 1024, %s51, [#allocation7], 128, 128, 8
    $region13: #{tpu_custom_call.1} parent=1 // pred_fallthru
      _
    // Predicated region
    $region14: #{tpu_custom_call.1} parent=1 // pred_check
      _
    $region15: #{tpu_custom_call.1} parent=1 // pred_check_branch
      %58 = sbr.rel (0) target = $region17
    $region16: #{tpu_custom_call.1} parent=1 // pred_region
      _
    $region17: #{tpu_custom_call.1} parent=1 // pred_fallthru
      _
    // Predicated region
    $region18: #{tpu_custom_call.1} parent=1 // pred_check
      _
    $region19: #{tpu_custom_call.1} parent=1 // pred_check_branch
      %60 = sbr.rel (0) target = $region21
    $region20: #{tpu_custom_call.1} parent=1 // pred_region
      %62 = vsyncadd [#allocation10], 0
      %s63 = sshll.u32 %s4, 4
      %s64 = int_to_ptr.hbm [resolvable:$true] %s63
      %s65 = sshll.u32 [#allocation9], 4
      %s66 = int_to_ptr.vmem [resolvable:$true] %s65
      %71 = dma.hbm_to_vmem [thread:$0]  %s64, 1024, %s66, [#allocation10], 128, 128, 8
    $region21: #{tpu_custom_call.1} parent=1 // pred_fallthru
      _
    // Predicated region
    $region22: #{tpu_custom_call.1} parent=1 // pred_check
      _
    $region23: #{tpu_custom_call.1} parent=1 // pred_check_branch
      %73 = sbr.rel (0) target = $region25
    $region24: #{tpu_custom_call.1} parent=1 // pred_region
      _
    $region25: #{tpu_custom_call.1} parent=1 // pred_fallthru
      _
    // Predicated region
    $region26: #{tpu_custom_call.1} parent=1 // pred_check
      _
    $region27: #{tpu_custom_call.1} parent=1 // pred_check_branch
      %75 = sbr.rel (0) target = $region29
    $region28: #{tpu_custom_call.1} parent=1 // pred_region
      _
    $region29: #{tpu_custom_call.1} parent=1 // pred_fallthru
      _
    // Predicated region
    $region30: #{tpu_custom_call.1} parent=1 // pred_check
      _
    $region31: #{tpu_custom_call.1} parent=1 // pred_check_branch
      %77 = sbr.rel (0) target = $region33
    $region32: #{tpu_custom_call.1} parent=1 // pred_region
      _
    $region33: #{tpu_custom_call.1} parent=1 // pred_fallthru
      _
    // Predicated region
    $region34: #{tpu_custom_call.1} parent=1 // pred_check
      _
    $region35: #{tpu_custom_call.1} parent=1 // pred_check_branch
      %79 = sbr.rel (0) target = $region37
    $region36: #{tpu_custom_call.1} parent=1 // pred_region
      %81 = dma.done [#allocation5], 256
    $region37: #{tpu_custom_call.1} parent=1 // pred_fallthru
      _
    // Predicated region
    $region38: #{tpu_custom_call.1} parent=1 // pred_check
      _
    $region39: #{tpu_custom_call.1} parent=1 // pred_check_branch
      %83 = sbr.rel (0) target = $region41
    $region40: #{tpu_custom_call.1} parent=1 // pred_region
      %85 = dma.done [#allocation7], 256
    $region41: #{tpu_custom_call.1} parent=1 // pred_fallthru
      _
    // Predicated region
    $region42: #{tpu_custom_call.1} parent=1 // pred_check
      _
    $region43: #{tpu_custom_call.1} parent=1 // pred_check_branch
      %87 = sbr.rel (0) target = $region45
    $region44: #{tpu_custom_call.1} parent=1 // pred_region
      %89 = dma.done [#allocation7], 1024
    $region45: #{tpu_custom_call.1} parent=1 // pred_fallthru
      _
    // Predicated region
    $region46: #{tpu_custom_call.1} parent=1 // pred_check
      _
    $region47: #{tpu_custom_call.1} parent=1 // pred_check_branch
      %91 = sbr.rel (0) target = $region49
    $region48: #{tpu_custom_call.1} parent=1 // pred_region
      %93 = dma.done [#allocation10], 1024
    $region49: #{tpu_custom_call.1} parent=1 // pred_fallthru
      _
    %p94 = scmp.eq.s32.totalorder 0, 0
    // Predicated region
    $region50: #{tpu_custom_call.1} parent=1 // pred_check
      %p95 = pneg %p94
    $region51: #{tpu_custom_call.1} parent=1 // pred_check_branch
      %97 = sbr.rel (%p95) target = $region53
    $region52: #{tpu_custom_call.1} parent=1 // pred_region
      %vm98 = vcmask 517120
      %99 = vst.msk [vmem:[#allocation2] sm:$0x3] %vm98, 0.0
    $region53: #{tpu_custom_call.1} parent=1 // pred_fallthru
      _
    %v100 = vld [vmem:[#allocation4] sm:$0xff]
    %v101 = vld [vmem:[#allocation4 + $0x8] sm:$0xff]
    %v102 = vld [vmem:[#allocation6] sm:$0xff]
    %v103 = vld [vmem:[#allocation6 + $0x8] sm:$0x7]
    %v104 = vld [vmem:[%s3] sm:$0x1]
    %v106 = vperm.slane %v104, 0
    %vm108 = vcmask 89088
    %v110 = vsel %vm108, %v100, 0
    %v113 = vsel %vm108, %v101, 0
    %vm115 = vcmask 1042432
    %v117 = vsel %vm115, %v103, 0
    %119 = vmatpush.msra.mxu0 0.0
    %120 = vmatpush.msra.mxu0 0.0
    %121 = vmatpush.msra.mxu0 0.0
    %122 = vmatpush.msra.mxu0 0.0
    %123 = vmatpush.msra.mxu0 0.0
    %124 = vmatpush.msra.mxu0 0.0
    %125 = vmatpush.msra.mxu0 0.0
    %126 = vmatpush.msra.mxu0 0.0
    %127 = vmatpush.msra.mxu0 0.0
    %128 = vmatpush.msra.mxu0 0.0
    %129 = vmatpush.msra.mxu0 0.0
    %130 = vmatpush.msra.mxu0 0.0
    %131 = vmatpush.msra.mxu0 0.0
    %132 = vmatpush.msra.mxu0 0.0
    %133 = vmatpush.msra.mxu0 %v117
    %134 = vmatpush.msra.mxu0 %v102
    %135 = vmatmul.f32.gmra.mxu0 %v110
    %v136 = vpop.f32.mrf.mxu0
    %v137 = vadd.f32 %v106, %v136
    %138 = vmatmul.f32.gmra.mxu0 %v113
    %v139 = vpop.f32.mrf.mxu0
    %v140 = vadd.f32 %v106, %v139
    %141 = vdwg.mxu0
    %v142 = vld [vmem:[#allocation8] sm:$0xff]
    %v143 = vld [vmem:[#allocation8 + $0x8] sm:$0xff]
    %v144 = vld [vmem:[#allocation8 + $0x10] sm:$0xff]
    %v145 = vld [vmem:[#allocation8 + $0x18] sm:$0xff]
    %v146 = vld [vmem:[#allocation8 + $0x20] sm:$0xff]
    %v147 = vld [vmem:[#allocation8 + $0x28] sm:$0xff]
    %v148 = vld [vmem:[#allocation8 + $0x30] sm:$0xff]
    %v149 = vld [vmem:[#allocation8 + $0x38] sm:$0xff]
    %v150 = vld [vmem:[#allocation2] sm:$0x3]
    %vm151 = vcmask 523264
    %v153 = vsel %vm151, %v150, 0
    %155 = vmatpush.msra.mxu0 0.0
    %156 = vmatpush.msra.mxu0 0.0
    %157 = vmatpush.msra.mxu0 0.0
    %158 = vmatpush.msra.mxu0 0.0
    %159 = vmatpush.msra.mxu0 0.0
    %160 = vmatpush.msra.mxu0 0.0
    %161 = vmatpush.msra.mxu0 0.0
    %162 = vmatpush.msra.mxu0 0.0
    %163 = vmatpush.msra.mxu0 %v149
    %164 = vmatpush.msra.mxu0 %v148
    %165 = vmatpush.msra.mxu0 %v147
    %166 = vmatpush.msra.mxu0 %v146
    %167 = vmatpush.msra.mxu0 %v145
    %168 = vmatpush.msra.mxu0 %v144
    %169 = vmatpush.msra.mxu0 %v143
    %170 = vmatpush.msra.mxu0 %v142
    %171 = vmatmul.f32.gmra.mxu0 %v153
    %v172 = vpop.f32.mrf.mxu0
    %v173 = vadd.f32 0.0, %v172
    %174 = vdwg.mxu0
    %v175 = vadd.f32 %v137, %v173
    %v176 = vtanh.pop %v175
    %v178 = vsel %vm151, %v176, 0
    %180 = vmatpush.msra.mxu0 0.0
    %181 = vmatpush.msra.mxu0 0.0
    %182 = vmatpush.msra.mxu0 0.0
    %183 = vmatpush.msra.mxu0 0.0
    %184 = vmatpush.msra.mxu0 0.0
    %185 = vmatpush.msra.mxu0 0.0
    %186 = vmatpush.msra.mxu0 0.0
    %187 = vmatpush.msra.mxu0 0.0
    %188 = vmatpush.msra.mxu0 %v149
    %189 = vmatpush.msra.mxu0 %v148
    %190 = vmatpush.msra.mxu0 %v147
    %191 = vmatpush.msra.mxu0 %v146
    %192 = vmatpush.msra.mxu0 %v145
    %193 = vmatpush.msra.mxu0 %v144
    %194 = vmatpush.msra.mxu0 %v143
    %195 = vmatpush.msra.mxu0 %v142
    %196 = vmatmul.f32.gmra.mxu0 %v178
    %v197 = vpop.f32.mrf.mxu0
    %v198 = vadd.f32 0.0, %v197
    %199 = vdwg.mxu0
    %v201 = vrot.slane %v198, 6
    %v203 = vadd.f32 %v137, %v201
    %v204 = vtanh.pop %v203
    %v206 = vrot.slane %v204, 2
    %v207 = vsel %vm151, %v206, 0
    %209 = vmatpush.msra.mxu0 0.0
    %210 = vmatpush.msra.mxu0 0.0
    %211 = vmatpush.msra.mxu0 0.0
    %212 = vmatpush.msra.mxu0 0.0
    %213 = vmatpush.msra.mxu0 0.0
    %214 = vmatpush.msra.mxu0 0.0
    %215 = vmatpush.msra.mxu0 0.0
    %216 = vmatpush.msra.mxu0 0.0
    %217 = vmatpush.msra.mxu0 %v149
    %218 = vmatpush.msra.mxu0 %v148
    %219 = vmatpush.msra.mxu0 %v147
    %220 = vmatpush.msra.mxu0 %v146
    %221 = vmatpush.msra.mxu0 %v145
    %222 = vmatpush.msra.mxu0 %v144
    %223 = vmatpush.msra.mxu0 %v143
    %224 = vmatpush.msra.mxu0 %v142
    %225 = vmatmul.f32.gmra.mxu0 %v207
    %v226 = vpop.f32.mrf.mxu0
    %v227 = vadd.f32 0.0, %v226
    %228 = vdwg.mxu0
    %v230 = vrot.slane %v227, 4
    %v232 = vadd.f32 %v137, %v230
    %v233 = vtanh.pop %v232
    %v235 = vrot.slane %v233, 4
    %v236 = vsel %vm151, %v235, 0
    %238 = vmatpush.msra.mxu0 0.0
    %239 = vmatpush.msra.mxu0 0.0
    %240 = vmatpush.msra.mxu0 0.0
    %241 = vmatpush.msra.mxu0 0.0
    %242 = vmatpush.msra.mxu0 0.0
    %243 = vmatpush.msra.mxu0 0.0
    %244 = vmatpush.msra.mxu0 0.0
    %245 = vmatpush.msra.mxu0 0.0
    %246 = vmatpush.msra.mxu0 %v149
    %247 = vmatpush.msra.mxu0 %v148
    %248 = vmatpush.msra.mxu0 %v147
    %249 = vmatpush.msra.mxu0 %v146
    %250 = vmatpush.msra.mxu0 %v145
    %251 = vmatpush.msra.mxu0 %v144
    %252 = vmatpush.msra.mxu0 %v143
    %253 = vmatpush.msra.mxu0 %v142
    %254 = vmatmul.f32.gmra.mxu0 %v236
    %v255 = vpop.f32.mrf.mxu0
    %v256 = vadd.f32 0.0, %v255
    %257 = vdwg.mxu0
    %v259 = vrot.slane %v256, 2
    %v261 = vadd.f32 %v137, %v259
    %v262 = vtanh.pop %v261
    %v264 = vrot.slane %v262, 6
    %v265 = vsel %vm151, %v264, 0
    %267 = vmatpush.msra.mxu0 0.0
    %268 = vmatpush.msra.mxu0 0.0
    %269 = vmatpush.msra.mxu0 0.0
    %270 = vmatpush.msra.mxu0 0.0
    %271 = vmatpush.msra.mxu0 0.0
    %272 = vmatpush.msra.mxu0 0.0
    %273 = vmatpush.msra.mxu0 0.0
    %274 = vmatpush.msra.mxu0 0.0
    %275 = vmatpush.msra.mxu0 %v149
    %276 = vmatpush.msra.mxu0 %v148
    %277 = vmatpush.msra.mxu0 %v147
    %278 = vmatpush.msra.mxu0 %v146
    %279 = vmatpush.msra.mxu0 %v145
    %280 = vmatpush.msra.mxu0 %v144
    %281 = vmatpush.msra.mxu0 %v143
    %282 = vmatpush.msra.mxu0 %v142
    %283 = vmatmul.f32.gmra.mxu0 %v265
    %v284 = vpop.f32.mrf.mxu0
    %v285 = vadd.f32 0.0, %v284
    %286 = vdwg.mxu0
    %v287 = vadd.f32 %v140, %v285
    %v288 = vtanh.pop %v287
    %v290 = vsel %vm151, %v288, 0
    %292 = vmatpush.msra.mxu0 0.0
    %293 = vmatpush.msra.mxu0 0.0
    %294 = vmatpush.msra.mxu0 0.0
    %295 = vmatpush.msra.mxu0 0.0
    %296 = vmatpush.msra.mxu0 0.0
    %297 = vmatpush.msra.mxu0 0.0
    %298 = vmatpush.msra.mxu0 0.0
    %299 = vmatpush.msra.mxu0 0.0
    %300 = vmatpush.msra.mxu0 %v149
    %301 = vmatpush.msra.mxu0 %v148
    %302 = vmatpush.msra.mxu0 %v147
    %303 = vmatpush.msra.mxu0 %v146
    %304 = vmatpush.msra.mxu0 %v145
    %305 = vmatpush.msra.mxu0 %v144
    %306 = vmatpush.msra.mxu0 %v143
    %307 = vmatpush.msra.mxu0 %v142
    %308 = vmatmul.f32.gmra.mxu0 %v290
    %v309 = vpop.f32.mrf.mxu0
    %v310 = vadd.f32 0.0, %v309
    %311 = vdwg.mxu0
    %v313 = vrot.slane %v310, 6
    %v315 = vadd.f32 %v140, %v313
    %v316 = vtanh.pop %v315
    %v318 = vrot.slane %v316, 2
    %v319 = vsel %vm151, %v318, 0
    %321 = vmatpush.msra.mxu0 0.0
    %322 = vmatpush.msra.mxu0 0.0
    %323 = vmatpush.msra.mxu0 0.0
    %324 = vmatpush.msra.mxu0 0.0
    %325 = vmatpush.msra.mxu0 0.0
    %326 = vmatpush.msra.mxu0 0.0
    %327 = vmatpush.msra.mxu0 0.0
    %328 = vmatpush.msra.mxu0 0.0
    %329 = vmatpush.msra.mxu0 %v149
    %330 = vmatpush.msra.mxu0 %v148
    %331 = vmatpush.msra.mxu0 %v147
    %332 = vmatpush.msra.mxu0 %v146
    %333 = vmatpush.msra.mxu0 %v145
    %334 = vmatpush.msra.mxu0 %v144
    %335 = vmatpush.msra.mxu0 %v143
    %336 = vmatpush.msra.mxu0 %v142
    %337 = vmatmul.f32.gmra.mxu0 %v319
    %v338 = vpop.f32.mrf.mxu0
    %v339 = vadd.f32 0.0, %v338
    %340 = vdwg.mxu0
    %v342 = vrot.slane %v339, 4
    %v344 = vadd.f32 %v140, %v342
    %v345 = vtanh.pop %v344
    %v347 = vrot.slane %v345, 4
    %v348 = vsel %vm151, %v347, 0
    %350 = vmatpush.msra.mxu0 0.0
    %351 = vmatpush.msra.mxu0 0.0
    %352 = vmatpush.msra.mxu0 0.0
    %353 = vmatpush.msra.mxu0 0.0
    %354 = vmatpush.msra.mxu0 0.0
    %355 = vmatpush.msra.mxu0 0.0
    %356 = vmatpush.msra.mxu0 0.0
    %357 = vmatpush.msra.mxu0 0.0
    %358 = vmatpush.msra.mxu0 %v149
    %359 = vmatpush.msra.mxu0 %v148
    %360 = vmatpush.msra.mxu0 %v147
    %361 = vmatpush.msra.mxu0 %v146
    %362 = vmatpush.msra.mxu0 %v145
    %363 = vmatpush.msra.mxu0 %v144
    %364 = vmatpush.msra.mxu0 %v143
    %365 = vmatpush.msra.mxu0 %v142
    %366 = vmatmul.f32.gmra.mxu0 %v348
    %v367 = vpop.f32.mrf.mxu0
    %v368 = vadd.f32 0.0, %v367
    %369 = vdwg.mxu0
    %v371 = vrot.slane %v368, 2
    %v373 = vadd.f32 %v140, %v371
    %v374 = vtanh.pop %v373
    %vm375 = vcmask 523270
    %376 = vst.msk [vmem:[#allocation2 - $0x6] sm:$0xc0] %vm375, %v374
    // Predicated region
    $region54: #{tpu_custom_call.1} parent=1 // pred_check
      %p377 = pneg %p94
    $region55: #{tpu_custom_call.1} parent=1 // pred_check_branch
      %379 = sbr.rel (%p377) target = $region57
    $region56: #{tpu_custom_call.1} parent=1 // pred_region
      %v380 = vld [vmem:[#allocation9] sm:$0xff]
      %v381 = vld [vmem:[#allocation9 + $0x8] sm:$0xff]
      %v382 = vld [vmem:[#allocation9 + $0x10] sm:$0xff]
      %v383 = vld [vmem:[#allocation9 + $0x18] sm:$0xff]
      %v384 = vld [vmem:[#allocation9 + $0x20] sm:$0xff]
      %v385 = vld [vmem:[#allocation9 + $0x28] sm:$0xff]
      %v386 = vld [vmem:[#allocation9 + $0x30] sm:$0xff]
      %v387 = vld [vmem:[#allocation9 + $0x38] sm:$0xff]
      %v388 = vld [vmem:[%s5] sm:$0x1]
      %v390 = vperm.slane %v388, 0
      %v393 = vrot.slane %v374, 6
      %v394 = vsel %vm151, %v393, 0
      %396 = vmatpush.msra.mxu0 0.0
      %397 = vmatpush.msra.mxu0 0.0
      %398 = vmatpush.msra.mxu0 0.0
      %399 = vmatpush.msra.mxu0 0.0
      %400 = vmatpush.msra.mxu0 0.0
      %401 = vmatpush.msra.mxu0 0.0
      %402 = vmatpush.msra.mxu0 0.0
      %403 = vmatpush.msra.mxu0 0.0
      %404 = vmatpush.msra.mxu0 %v387
      %405 = vmatpush.msra.mxu0 %v386
      %406 = vmatpush.msra.mxu0 %v385
      %407 = vmatpush.msra.mxu0 %v384
      %408 = vmatpush.msra.mxu0 %v383
      %409 = vmatpush.msra.mxu0 %v382
      %410 = vmatpush.msra.mxu0 %v381
      %411 = vmatpush.msra.mxu0 %v380
      %412 = vmatmul.f32.gmra.mxu0 %v394
      %v413 = vpop.f32.mrf.mxu0
      %v414 = vadd.f32 %v390, %v413
      %415 = vdwg.mxu0
      %v416 = vmax.f32 %v414, 0.0
      %v417 = vld [vmem:[%s6] sm:$0x1]
      %v419 = vperm.slane %v417, 0
      %v421 = vmul.f32 %v416, %v419
      %vm422 = vcmask 1041408
      %v423 = vsel %vm422, %v421, 0.0
      %424 = vadd.xlane.f32.xlu0 %v423
      %v425 = vpop.xlane.xlu0 %424
      %v426 = vld [vmem:[#allocation3] sm:$0x1]
      %v428 = vperm.slane %v426, 0
      %v430 = vadd.f32 %v425, %v428
      %vm431 = vcmask 1024
      %432 = vst.msk [vmem:[%s8] sm:$0x3] %vm431, %v430
    $region57: #{tpu_custom_call.1} parent=1 // pred_fallthru
      _
    // Predicated region
    $region58: #{tpu_custom_call.1} parent=1 // pred_check
      _
    $region59: #{tpu_custom_call.1} parent=1 // pred_check_branch
      %434 = sbr.rel (0) target = $region61
    $region60: #{tpu_custom_call.1} parent=1 // pred_region
      _
    $region61: #{tpu_custom_call.1} parent=1 // pred_fallthru
      _
    // Predicated region
    $region62: #{tpu_custom_call.1} parent=1 // pred_check
      _
    $region63: #{tpu_custom_call.1} parent=1 // pred_check_branch
      %436 = sbr.rel (0) target = $region65
    $region64: #{tpu_custom_call.1} parent=1 // pred_region
      _
    $region65: #{tpu_custom_call.1} parent=1 // pred_fallthru
      _
    %437 = vsyncpa [#allocation5], 1
    %438 = vsyncpa [#allocation7], 1
    %439 = vsyncpa [#allocation10], 1

</llo_original>
